<compile_context>
chip_gen: v6e
topology: v6e:2x2x1
jax: 0.10.0
libtpu: 0.0.40
codegen_flags: <defaults>
</compile_context>

<pallas_src>
import math
import functools

import jax
import jax.numpy as jnp
from jax.experimental import pallas as pl
from jax.experimental.pallas import tpu as pltpu


OUT_W = 8  # output slab lane width: col 0=log_prob, 1=value, 2=entropy, rest 0


def _relu6(x):
    return jnp.minimum(jnp.maximum(x, 0.0), 6.0)


def _softplus(x):
    # numerically stable softplus = max(x,0) + log1p(exp(-|x|))
    return jnp.maximum(x, 0.0) + jnp.log1p(jnp.exp(-jnp.abs(x)))


# ----------------------------- kernel body ----------------------------------

def actor_critic_kernel(state_ref, action_ref,
                        w1_ref, b1_ref, w2_ref, b2_ref, wh_ref, bh_ref,
                        out_ref, *,
                        action_scaling: float, max_log_std: float,
                        action_dim: int, approx_recip: bool):
    """Fused ActorCritic.get_evaluate() for one batch tile.

    Packed weights (built once in the wrapper):
      w1 = [actor_w1 | critic_w1]                      : [obs, 2H]
      w2 = blockdiag(actor_w2, critic_w2)              : [2H, 2H]
      wh = [[mu_w | log_std_w |     0    ],
            [  0  |     0     | critic_w3]]            : [2H, 2A+1]
    """
    f32 = jnp.float32

    def mm(x, w_ref):
        # Cast activation to the (possibly bf16) weight dtype for the MXU,
        # accumulate in f32; all elementwise math stays f32.
        if x.dtype != w_ref.dtype:
            x = x.astype(w_ref.dtype)
        return jnp.dot(x, w_ref[...], preferred_element_type=f32)

    x = state_ref[...]
    a = action_ref[...]
    if a.dtype != f32:
        a = a.astype(f32)

    # Fused actor + critic trunks: two 128-wide MXU matmuls.
    h = _relu6(mm(x, w1_ref) + b1_ref[...])
    h = _relu6(mm(h, w2_ref) + b2_ref[...])

    # Fused heads: mu | log_std | value in a single matmul -> [TB, 2A+1].
    head = mm(h, wh_ref) + bh_ref[...]

    A = action_dim
    mu = jnp.tanh(head[:, :A]) * action_scaling
    # NOTE: clip with lower > upper (action_scaling < 1) degenerates exactly
    # like torch.clamp (max applied last); semantics preserved.
    log_std = jnp.clip(head[:, A:2 * A], -max_log_std, max_log_std)
    std = _softplus(log_std)
    value = head[:, 2 * A:2 * A + 1]                                # [TB, 1]

    # Normal(mu, std): log_prob(action).sum(-1) and entropy().sum(-1)
    log_2pi = math.log(2.0 * math.pi)
    log_std_val = jnp.log(std)
    inv_var = pl.reciprocal(std * std, approx=approx_recip)         # EUP slot
    logp = -0.5 * (a - mu) ** 2 * inv_var - log_std_val - 0.5 * log_2pi
    logp_sum = jnp.sum(logp, axis=-1, keepdims=True)                # [TB, 1]
    ent_sum = (jnp.sum(log_std_val, axis=-1, keepdims=True)
               + A * (0.5 + 0.5 * log_2pi))                         # [TB, 1]

    # Narrow 8-lane output slab: cols 0..2 carry data, tiny writeback DMA.
    lane = jax.lax.broadcasted_iota(jnp.int32, out_ref.shape, 1)
    out_ref[...] = jnp.where(lane == 0, logp_sum,
                   jnp.where(lane == 1, value,
                   jnp.where(lane == 2, ent_sum, 0.0)))


# ----------------------------- weight packing --------------------------------

def pack_params(params, dtype=jnp.float32):
    """Fuse the 14 raw (W, b) tensors into 3 packed matmul weights + biases.

    Weights are stored in `dtype` (use jnp.bfloat16 for the MXU fast path);
    biases are always kept f32.
    """
    (aw1, ab1, aw2, ab2, mw, mb, lw, lb,
     cw1, cb1, cw2, cb2, cw3, cb3) = params
    f32 = jnp.float32
    H = aw1.shape[1]          # hidden = 64
    A = mw.shape[1]           # action_dim

    w1 = jnp.concatenate([aw1, cw1], axis=1)                  # [obs, 2H]
    b1 = jnp.concatenate([ab1, cb1], axis=1)                  # [1,   2H]

    zero = jnp.zeros((H, H), f32)
    w2 = jnp.concatenate(
        [jnp.concatenate([aw2, zero], axis=1),
         jnp.concatenate([zero, cw2], axis=1)], axis=0)       # [2H, 2H]
    b2 = jnp.concatenate([ab2, cb2], axis=1)                  # [1,  2H]

    wh = jnp.zeros((2 * H, 2 * A + 1), f32)
    wh = wh.at[:H, :A].set(mw)
    wh = wh.at[:H, A:2 * A].set(lw)
    wh = wh.at[H:, 2 * A:].set(cw3)                           # [2H, 2A+1]
    bh = jnp.concatenate([mb, lb, cb3], axis=1)               # [1,  2A+1]

    return (w1.astype(dtype), b1.astype(f32),
            w2.astype(dtype), b2.astype(f32),
            wh.astype(dtype), bh.astype(f32))


# ----------------------------- wrapper ----------------------------------------

def actor_critic_evaluate(state, action, packed_params, action_scaling,
                          action_dim, block_b=4096, approx_recip=True):
    """Pallas equivalent of ActorCritic.get_evaluate(state, action).

    Returns (log_probs [B], state_value [B], dist_entropy [B]).
    """
    B, obs = state.shape
    A = action_dim
    max_log_std = float(math.log(action_scaling))

    # Batch tile: multiple of 8 sublanes, capped at block_b.  No input padding:
    # a ragged boundary tile is clipped by Pallas (row-local garbage only).
    TB = min(block_b, -(-B // 8) * 8)
    TB = max(8, (TB // 8) * 8)
    grid = (pl.cdiv(B, TB),)

    w1, b1, w2, b2, wh, bh = packed_params

    kernel = functools.partial(
        actor_critic_kernel,
        action_scaling=float(action_scaling),   # Python scalars -> baked-in
        max_log_std=max_log_std,
        action_dim=int(A),
        approx_recip=bool(approx_recip))

    def w_spec(arr):
        # weights/biases stay VMEM-resident across all batch tiles
        return pl.BlockSpec(arr.shape, lambda i: (0, 0))

    out = pl.pallas_call(
        kernel,
        out_shape=jax.ShapeDtypeStruct((B, OUT_W), jnp.float32),
        grid=grid,
        in_specs=[
            pl.BlockSpec((TB, obs), lambda i: (i, 0)),   # state  (streamed)
            pl.BlockSpec((TB, A), lambda i: (i, 0)),     # action (streamed)
            w_spec(w1), w_spec(b1),
            w_spec(w2), w_spec(b2),
            w_spec(wh), w_spec(bh),
        ],
        out_specs=pl.BlockSpec((TB, OUT_W), lambda i: (i, 0)),
        compiler_params=pltpu.CompilerParams(
            dimension_semantics=("parallel",)),
    )(state, action, w1, b1, w2, b2, wh, bh)

    return out[:, 0], out[:, 1], out[:, 2]


# ----------------------------- param init ------------------------------------

def init_params(key, observ_dim, action_dim, hidden=64):
    """Deterministic init mirroring the module shapes (xavier_uniform W, N(0,0.01) b)."""
    def xavier(k, fan_in, fan_out):
        limit = math.sqrt(6.0 / (fan_in + fan_out))
        return jax.random.uniform(k, (fan_in, fan_out), jnp.float32, -limit, limit)

    def bias(k, n):
        return 0.01 * jax.random.normal(k, (1, n), jnp.float32)

    ks = jax.random.split(key, 16)
    return (
        # Actor trunk
        xavier(ks[0], observ_dim, hidden), bias(ks[1], hidden),
        xavier(ks[2], hidden, hidden),     bias(ks[3], hidden),
        # mu_layer, log_std
        xavier(ks[4], hidden, action_dim), bias(ks[5], action_dim),
        xavier(ks[6], hidden, action_dim), bias(ks[7], action_dim),
        # Critic
        xavier(ks[8], observ_dim, hidden), bias(ks[9], hidden),
        xavier(ks[10], hidden, hidden),    bias(ks[11], hidden),
        xavier(ks[12], hidden, 1),         bias(ks[13], 1),
    )


# ----------------------------- reference (plain JAX) --------------------------

def reference_evaluate(state, action, params, action_scaling):
    (aw1, ab1, aw2, ab2, mw, mb, lw, lb, cw1, cb1, cw2, cb2, cw3, cb3) = params
    relu6 = lambda x: jnp.clip(x, 0.0, 6.0)
    softplus = lambda x: jnp.maximum(x, 0.0) + jnp.log1p(jnp.exp(-jnp.abs(x)))
    max_log = math.log(action_scaling)

    h = relu6(state @ aw1 + ab1)
    h = relu6(h @ aw2 + ab2)
    mu = jnp.tanh(h @ mw + mb) * action_scaling
    std = softplus(jnp.clip(h @ lw + lb, -max_log, max_log))

    log_2pi = math.log(2.0 * math.pi)
    logp = (-((action - mu) ** 2) / (2 * std * std) - jnp.log(std) - 0.5 * log_2pi).sum(-1)
    ent = (0.5 + 0.5 * log_2pi + jnp.log(std)).sum(-1)

    c = relu6(state @ cw1 + cb1)
    c = relu6(c @ cw2 + cb2)
    value = (c @ cw3 + cb3)[:, 0]
    return logp, value, ent


# ----------------------------- main -------------------------------------------

if __name__ == "__main__":
    B, observ_dim, action_dim = 16, 32, 4
    action_scaling = 2.0

    key = jax.random.PRNGKey(0)
    k_state, k_action, k_params = jax.random.split(key, 3)

    state = jax.random.normal(k_state, (B, observ_dim), jnp.float32)
    action = jax.random.normal(k_action, (B, action_dim), jnp.float32)
    params = init_params(k_params, observ_dim, action_dim)

    r_logp, r_value, r_ent = reference_evaluate(state, action, params, action_scaling)

    # 1) f32 weights + exact reciprocal: strict parity with module semantics.
    #    block_b=8 -> grid of 2 batch tiles at this small test size.
    packed_f32 = pack_params(params, jnp.float32)
    logp, value, ent = actor_critic_evaluate(
        state, action, packed_f32, action_scaling, action_dim,
        block_b=8, approx_recip=False)
    jax.block_until_ready((logp, value, ent))
    assert jnp.allclose(logp, r_logp, atol=1e-4, rtol=1e-4), (logp, r_logp)
    assert jnp.allclose(value, r_value, atol=1e-4, rtol=1e-4), (value, r_value)
    assert jnp.allclose(ent, r_ent, atol=1e-4, rtol=1e-4), (ent, r_ent)

    # 2) ragged batch (no-pad path): B=13 with TB=8 -> clipped boundary tile.
    logp13, value13, ent13 = actor_critic_evaluate(
        state[:13], action[:13], packed_f32, action_scaling, action_dim,
        block_b=8, approx_recip=False)
    jax.block_until_ready((logp13, value13, ent13))
    assert jnp.allclose(logp13, r_logp[:13], atol=1e-4, rtol=1e-4)
    assert jnp.allclose(value13, r_value[:13], atol=1e-4, rtol=1e-4)
    assert jnp.allclose(ent13, r_ent[:13], atol=1e-4, rtol=1e-4)

    # 3) perf path: bf16 MXU operands + approx reciprocal (loose parity).
    packed_bf16 = pack_params(params, jnp.bfloat16)
    logp_b, value_b, ent_b = actor_critic_evaluate(
        state, action, packed_bf16, action_scaling, action_dim,
        block_b=8, approx_recip=True)
    jax.block_until_ready((logp_b, value_b, ent_b))
    assert jnp.allclose(logp_b, r_logp, atol=1e-1, rtol=1e-1), (logp_b, r_logp)
    assert jnp.allclose(value_b, r_value, atol=1e-1, rtol=1e-1), (value_b, r_value)
    assert jnp.allclose(ent_b, r_ent, atol=1e-1, rtol=1e-1), (ent_b, r_ent)

    print("KERNEL_OK")
</pallas_src>

<mosaic_0001>
module attributes {stable_mosaic.version = 11 : i64} {
  func.func @actor_critic_kernel(%arg0: i32, %arg1: memref<8x32xf32, #tpu.memory_space<vmem>>, %arg2: memref<8x4xf32, #tpu.memory_space<vmem>>, %arg3: memref<32x128xf32, #tpu.memory_space<vmem>>, %arg4: memref<1x128xf32, #tpu.memory_space<vmem>>, %arg5: memref<128x128xf32, #tpu.memory_space<vmem>>, %arg6: memref<1x128xf32, #tpu.memory_space<vmem>>, %arg7: memref<128x9xf32, #tpu.memory_space<vmem>>, %arg8: memref<1x9xf32, #tpu.memory_space<vmem>>, %arg9: memref<8x8xf32, #tpu.memory_space<vmem>>) attributes {dimension_semantics = [#tpu.dimension_semantics<parallel>], iteration_bounds = array<i64: 2>, scalar_prefetch = 0 : i64, scratch_operands = 0 : i64, tpu.core_type = #tpu.core_type<tc>, window_params = [{transform_indices = @transform_0, window_bounds = array<i64: 8, 32>}, {transform_indices = @transform_1, window_bounds = array<i64: 8, 4>}, {pipeline_mode = #tpu.pipeline_mode<synchronous>, transform_indices = @transform_2, window_bounds = array<i64: 32, 128>}, {pipeline_mode = #tpu.pipeline_mode<synchronous>, transform_indices = @transform_3, window_bounds = array<i64: 1, 128>}, {pipeline_mode = #tpu.pipeline_mode<synchronous>, transform_indices = @transform_4, window_bounds = array<i64: 128, 128>}, {pipeline_mode = #tpu.pipeline_mode<synchronous>, transform_indices = @transform_5, window_bounds = array<i64: 1, 128>}, {pipeline_mode = #tpu.pipeline_mode<synchronous>, transform_indices = @transform_6, window_bounds = array<i64: 128, 9>}, {pipeline_mode = #tpu.pipeline_mode<synchronous>, transform_indices = @transform_7, window_bounds = array<i64: 1, 9>}, {transform_indices = @transform_8, window_bounds = array<i64: 8, 8>}]} {
    %c0 = arith.constant 0 : index
    %c0_0 = arith.constant 0 : index
    %0 = vector.load %arg1[%c0, %c0_0] : memref<8x32xf32, #tpu.memory_space<vmem>>, vector<8x32xf32>
    %c0_1 = arith.constant 0 : index
    %c0_2 = arith.constant 0 : index
    %1 = vector.load %arg2[%c0_1, %c0_2] : memref<8x4xf32, #tpu.memory_space<vmem>>, vector<8x4xf32>
    %c0_3 = arith.constant 0 : index
    %c0_4 = arith.constant 0 : index
    %2 = vector.load %arg3[%c0_3, %c0_4] : memref<32x128xf32, #tpu.memory_space<vmem>>, vector<32x128xf32>
    %cst = arith.constant dense<0.000000e+00> : vector<8x128xf32>
    %3 = tpu.matmul %0, %2, %cst {dimension_numbers = #tpu.dot_dimension_numbers<[1], [0], [0], [1], [0, 0, 1, 1], [], []>} : vector<8x32xf32>, vector<32x128xf32>, vector<8x128xf32> -> vector<8x128xf32>
    %c0_5 = arith.constant 0 : index
    %c0_6 = arith.constant 0 : index
    %4 = vector.load %arg4[%c0_5, %c0_6] : memref<1x128xf32, #tpu.memory_space<vmem>>, vector<1x128xf32>
    %5 = vector.broadcast %4 : vector<1x128xf32> to vector<8x128xf32>
    %6 = arith.addf %3, %5 : vector<8x128xf32>
    %cst_7 = arith.constant 0.000000e+00 : f32
    %7 = vector.broadcast %cst_7 : f32 to vector<8x128xf32>
    %8 = arith.maximumf %6, %7 : vector<8x128xf32>
    %cst_8 = arith.constant 6.000000e+00 : f32
    %9 = vector.broadcast %cst_8 : f32 to vector<8x128xf32>
    %10 = arith.minimumf %8, %9 : vector<8x128xf32>
    %c0_9 = arith.constant 0 : index
    %c0_10 = arith.constant 0 : index
    %11 = vector.load %arg5[%c0_9, %c0_10] : memref<128x128xf32, #tpu.memory_space<vmem>>, vector<128x128xf32>
    %cst_11 = arith.constant dense<0.000000e+00> : vector<8x128xf32>
    %12 = tpu.matmul %10, %11, %cst_11 {dimension_numbers = #tpu.dot_dimension_numbers<[1], [0], [0], [1], [0, 0, 1, 1], [], []>} : vector<8x128xf32>, vector<128x128xf32>, vector<8x128xf32> -> vector<8x128xf32>
    %c0_12 = arith.constant 0 : index
    %c0_13 = arith.constant 0 : index
    %13 = vector.load %arg6[%c0_12, %c0_13] : memref<1x128xf32, #tpu.memory_space<vmem>>, vector<1x128xf32>
    %14 = vector.broadcast %13 : vector<1x128xf32> to vector<8x128xf32>
    %15 = arith.addf %12, %14 : vector<8x128xf32>
    %cst_14 = arith.constant 0.000000e+00 : f32
    %16 = vector.broadcast %cst_14 : f32 to vector<8x128xf32>
    %17 = arith.maximumf %15, %16 : vector<8x128xf32>
    %cst_15 = arith.constant 6.000000e+00 : f32
    %18 = vector.broadcast %cst_15 : f32 to vector<8x128xf32>
    %19 = arith.minimumf %17, %18 : vector<8x128xf32>
    %c0_16 = arith.constant 0 : index
    %c0_17 = arith.constant 0 : index
    %20 = vector.load %arg7[%c0_16, %c0_17] : memref<128x9xf32, #tpu.memory_space<vmem>>, vector<128x9xf32>
    %cst_18 = arith.constant dense<0.000000e+00> : vector<8x9xf32>
    %21 = tpu.matmul %19, %20, %cst_18 {dimension_numbers = #tpu.dot_dimension_numbers<[1], [0], [0], [1], [0, 0, 1, 1], [], []>} : vector<8x128xf32>, vector<128x9xf32>, vector<8x9xf32> -> vector<8x9xf32>
    %c0_19 = arith.constant 0 : index
    %c0_20 = arith.constant 0 : index
    %22 = vector.load %arg8[%c0_19, %c0_20] : memref<1x9xf32, #tpu.memory_space<vmem>>, vector<1x9xf32>
    %23 = vector.broadcast %22 : vector<1x9xf32> to vector<8x9xf32>
    %24 = arith.addf %21, %23 : vector<8x9xf32>
    %25 = vector.extract_strided_slice %24 {offsets = [0, 0], sizes = [8, 4], strides = [1, 1]} : vector<8x9xf32> to vector<8x4xf32>
    %26 = math.tanh %25 : vector<8x4xf32>
    %cst_21 = arith.constant 2.000000e+00 : f32
    %27 = vector.broadcast %cst_21 : f32 to vector<8x4xf32>
    %28 = arith.mulf %26, %27 : vector<8x4xf32>
    %29 = vector.extract_strided_slice %24 {offsets = [0, 4], sizes = [8, 4], strides = [1, 1]} : vector<8x9xf32> to vector<8x4xf32>
    %cst_22 = arith.constant -0.693147182 : f32
    %cst_23 = arith.constant 0.693147182 : f32
    %30 = vector.broadcast %cst_22 : f32 to vector<8x4xf32>
    %31 = arith.maximumf %30, %29 : vector<8x4xf32>
    %32 = vector.broadcast %cst_23 : f32 to vector<8x4xf32>
    %33 = arith.minimumf %32, %31 : vector<8x4xf32>
    %cst_24 = arith.constant 0.000000e+00 : f32
    %34 = vector.broadcast %cst_24 : f32 to vector<8x4xf32>
    %35 = arith.maximumf %33, %34 : vector<8x4xf32>
    %36 = math.absf %33 : vector<8x4xf32>
    %cst_25 = arith.constant 0.000000e+00 : f32
    %37 = vector.broadcast %cst_25 : f32 to vector<8x4xf32>
    %38 = arith.subf %37, %36 : vector<8x4xf32>
    %39 = math.exp %38 : vector<8x4xf32>
    %40 = math.log1p %39 : vector<8x4xf32>
    %41 = arith.addf %35, %40 : vector<8x4xf32>
    %42 = vector.extract_strided_slice %24 {offsets = [0, 8], sizes = [8, 1], strides = [1, 1]} : vector<8x9xf32> to vector<8x1xf32>
    %43 = math.log %41 : vector<8x4xf32>
    %44 = arith.mulf %41, %41 : vector<8x4xf32>
    %45 = tpu.reciprocal %44 : vector<8x4xf32> -> vector<8x4xf32>
    %46 = arith.subf %1, %28 : vector<8x4xf32>
    %47 = arith.mulf %46, %46 : vector<8x4xf32>
    %cst_26 = arith.constant -5.000000e-01 : f32
    %48 = vector.broadcast %cst_26 : f32 to vector<8x4xf32>
    %49 = arith.mulf %48, %47 : vector<8x4xf32>
    %50 = arith.mulf %49, %45 : vector<8x4xf32>
    %51 = arith.subf %50, %43 : vector<8x4xf32>
    %cst_27 = arith.constant 0.918938517 : f32
    %52 = vector.broadcast %cst_27 : f32 to vector<8x4xf32>
    %53 = arith.subf %51, %52 : vector<8x4xf32>
    %cst_28 = arith.constant dense<0.000000e+00> : vector<8xf32>
    %54 = vector.multi_reduction <add>, %53, %cst_28 [1] : vector<8x4xf32> to vector<8xf32>
    %55 = vector.shape_cast %54 : vector<8xf32> to vector<8x1xf32>
    %cst_29 = arith.constant dense<0.000000e+00> : vector<8xf32>
    %56 = vector.multi_reduction <add>, %43, %cst_29 [1] : vector<8x4xf32> to vector<8xf32>
    %57 = vector.shape_cast %56 : vector<8xf32> to vector<8x1xf32>
    %cst_30 = arith.constant 5.67575407 : f32
    %58 = vector.broadcast %cst_30 : f32 to vector<8x1xf32>
    %59 = arith.addf %57, %58 : vector<8x1xf32>
    %60 = tpu.iota {dimensions = array<i32: 1>} : vector<8x8xi32>
    %c0_i32 = arith.constant 0 : i32
    %61 = vector.broadcast %c0_i32 : i32 to vector<8x8xi32>
    %62 = arith.cmpi eq, %60, %61 : vector<8x8xi32>
    %c1_i32 = arith.constant 1 : i32
    %63 = vector.broadcast %c1_i32 : i32 to vector<8x8xi32>
    %64 = arith.cmpi eq, %60, %63 : vector<8x8xi32>
    %c2_i32 = arith.constant 2 : i32
    %65 = vector.broadcast %c2_i32 : i32 to vector<8x8xi32>
    %66 = arith.cmpi eq, %60, %65 : vector<8x8xi32>
    %cst_31 = arith.constant 0.000000e+00 : f32
    %67 = vector.shape_cast %59 : vector<8x1xf32> to vector<8x1xf32>
    %68 = vector.broadcast %67 : vector<8x1xf32> to vector<8x8xf32>
    %69 = vector.broadcast %cst_31 : f32 to vector<8x8xf32>
    %70 = arith.select %66, %68, %69 : vector<8x8xi1>, vector<8x8xf32>
    %71 = vector.shape_cast %42 : vector<8x1xf32> to vector<8x1xf32>
    %72 = vector.broadcast %71 : vector<8x1xf32> to vector<8x8xf32>
    %73 = arith.select %64, %72, %70 : vector<8x8xi1>, vector<8x8xf32>
    %74 = vector.shape_cast %55 : vector<8x1xf32> to vector<8x1xf32>
    %75 = vector.broadcast %74 : vector<8x1xf32> to vector<8x8xf32>
    %76 = arith.select %62, %75, %73 : vector<8x8xi1>, vector<8x8xf32>
    %c0_32 = arith.constant 0 : index
    %c0_33 = arith.constant 0 : index
    %77 = vector.load %arg9[%c0_32, %c0_33] : memref<8x8xf32, #tpu.memory_space<vmem>>, vector<8x8xf32>
    tpu.vector_store %arg9[%c0_32, %c0_33], %76 {strides = array<i32>} : memref<8x8xf32, #tpu.memory_space<vmem>>, vector<8x8xf32>,
    return
  }
  func.func @transform_0(%arg0: i32) -> (i32, i32) {
    %c0_i32 = arith.constant 0 : i32
    %c0_i32_0 = arith.constant 0 : i32
    return %arg0, %c0_i32 : i32, i32
  }
  func.func @transform_1(%arg0: i32) -> (i32, i32) {
    %c0_i32 = arith.constant 0 : i32
    %c0_i32_0 = arith.constant 0 : i32
    return %arg0, %c0_i32 : i32, i32
  }
  func.func @transform_2(%arg0: i32) -> (i32, i32) {
    %c0_i32 = arith.constant 0 : i32
    %c0_i32_0 = arith.constant 0 : i32
    %c0_i32_1 = arith.constant 0 : i32
    return %c0_i32, %c0_i32_0 : i32, i32
  }
  func.func @transform_3(%arg0: i32) -> (i32, i32) {
    %c0_i32 = arith.constant 0 : i32
    %c0_i32_0 = arith.constant 0 : i32
    %c0_i32_1 = arith.constant 0 : i32
    return %c0_i32, %c0_i32_0 : i32, i32
  }
  func.func @transform_4(%arg0: i32) -> (i32, i32) {
    %c0_i32 = arith.constant 0 : i32
    %c0_i32_0 = arith.constant 0 : i32
    %c0_i32_1 = arith.constant 0 : i32
    return %c0_i32, %c0_i32_0 : i32, i32
  }
  func.func @transform_5(%arg0: i32) -> (i32, i32) {
    %c0_i32 = arith.constant 0 : i32
    %c0_i32_0 = arith.constant 0 : i32
    %c0_i32_1 = arith.constant 0 : i32
    return %c0_i32, %c0_i32_0 : i32, i32
  }
  func.func @transform_6(%arg0: i32) -> (i32, i32) {
    %c0_i32 = arith.constant 0 : i32
    %c0_i32_0 = arith.constant 0 : i32
    %c0_i32_1 = arith.constant 0 : i32
    return %c0_i32, %c0_i32_0 : i32, i32
  }
  func.func @transform_7(%arg0: i32) -> (i32, i32) {
    %c0_i32 = arith.constant 0 : i32
    %c0_i32_0 = arith.constant 0 : i32
    %c0_i32_1 = arith.constant 0 : i32
    return %c0_i32, %c0_i32_0 : i32, i32
  }
  func.func @transform_8(%arg0: i32) -> (i32, i32) {
    %c0_i32 = arith.constant 0 : i32
    %c0_i32_0 = arith.constant 0 : i32
    return %arg0, %c0_i32 : i32, i32
  }
}

</mosaic_0001>

<llo_original>
// kernel: tpu_custom_call.1
$region0: #{tpu_custom_call.1}
  #allocation0 [shape = 'u32[]', space=smem, size = 0x4, offset = 0x4, fixed_abs, tag = 'smem constant byte address 0x4 - core index']
  #allocation1 [shape = 'u32[144,128]{1,0:T(1,128)}', space=vmem, size = 0x12000, scoped, tag = 'internal scratch']
  %s0 = inlined_call_operand.hbm [shape: f32[16,32], index: 0, kind: input, shape index: {}]
  %s1 = inlined_call_operand.vmem [shape: f32[16,4], index: 1, kind: input, shape index: {}]
  %s2 = inlined_call_operand.vmem [shape: f32[32,128], index: 2, kind: input, shape index: {}]
  %s3 = inlined_call_operand.vmem [shape: f32[1,128], index: 3, kind: input, shape index: {}]
  %s4 = inlined_call_operand.vmem [shape: f32[128,128], index: 4, kind: input, shape index: {}]
  %s5 = inlined_call_operand.vmem [shape: f32[1,128], index: 5, kind: input, shape index: {}]
  %s6 = inlined_call_operand.vmem [shape: f32[128,9], index: 6, kind: input, shape index: {}]
  %s7 = inlined_call_operand.vmem [shape: f32[1,9], index: 7, kind: input, shape index: {}]
  %s8 = inlined_call_operand.vmem [shape: f32[16,8], index: 8, kind: output, shape index: {}]
  %s9 = sld [smem:[#allocation0]]
  $region69: #{tpu_custom_call.1} parent=0
    _
  %s11 = ssub.s32 1, %s9
  %s12 = scalar_select 0, %s11, %s9
  $region1: #{tpu_custom_call.1} parent=0
    #allocation2 [shape = 'u8[8192]{0}', space=vmem, size = 0x2000, scoped, tag = 'input window, operand 0']
    #allocation3 [shape = 's32[2]{0}', space=sflag, size = 0x8, scoped, tag = 'scoped memory for tpu_custom_call.1']
    %13 = vsyncpa [#allocation3], 0
    %s14 = scalar_lea.sflag [#allocation3], 1
    %15 = vsyncpa %s14, 0
    loop: start=0, step=1, limit=4
    $region2: #{tpu_custom_call.1} parent=1 // loop_pre_header
      _
    $region3: #{tpu_custom_call.1} parent=1 // loop_header
      %s17 = sphi 0, %s21
      %p18 = scmp.ge.s32.totalorder %s17, 4
      %s27 = sphi 0, %s29
      %s30 = sphi 0, %s27
      %s31 = sphi 0, %s30
      %s47 = sphi 0, %s31
      %s53 = sphi 0, %s55
      %s56 = sphi 0, %s53
      %s57 = sphi 0, %s56
      %s73 = sphi 0, %s57
      %s77 = sphi 0, %s77
      %s79 = sphi 0, %s77
      %s80 = sphi 0, %s79
      %s94 = sphi 0, %s80
      %s98 = sphi 0, %s98
      %s100 = sphi 0, %s98
      %s101 = sphi 0, %s100
      %s115 = sphi 0, %s101
      %s119 = sphi 0, %s119
      %s121 = sphi 0, %s119
      %s122 = sphi 0, %s121
      %s136 = sphi 0, %s122
      %s140 = sphi 0, %s140
      %s142 = sphi 0, %s140
      %s143 = sphi 0, %s142
      %s157 = sphi 0, %s143
      %s161 = sphi 0, %s161
      %s163 = sphi 0, %s161
      %s164 = sphi 0, %s163
      %s178 = sphi 0, %s164
      %s182 = sphi 0, %s182
      %s184 = sphi 0, %s182
      %s185 = sphi 0, %s184
      %s199 = sphi 0, %s185
      %s205 = sphi 0, %s207
      %s208 = sphi 0, %s205
      %s209 = sphi 0, %s208
      %s225 = sphi 0, %s209
    $region4: #{tpu_custom_call.1} parent=1 // loop_header_branch
      %20 = sbr.rel (%p18) target = $region8
    $region5: #{tpu_custom_call.1} parent=1 // loop_body
      %s22 = ssub.s32 %s17, 1
      %s23 = ssub.s32 %s17, 2
      %s24 = sadd.s32 %s17, 1
      %s25 = ssub.s32 %s17, %s24
      %p26 = scmp.eq.s32.totalorder %s25, 0
      %s28 = sadd.s32 %s27, 1
      %s29 = scalar_select %p26, %s27, %s28
      %p32 = pneg %p26
      %p33 = scmp.eq.s32.totalorder %s17, 1
      %p34 = por %p32, %p33
      %p35 = scmp.ne.s32.totalorder %s27, %s30
      %p36 = scmp.eq.s32.totalorder %s17, 0
      %p37 = por %p35, %p36
      %p38 = scmp.ne.s32.totalorder %s27, %s30
      %p39 = scmp.eq.s32.totalorder %s22, 1
      %p40 = por %p38, %p39
      %p41 = scmp.ne.s32.totalorder %s30, %s31
      %p42 = scmp.eq.s32.totalorder %s22, 0
      %p43 = por %p41, %p42
      %p44 = scmp.ne.s32.totalorder %s30, %s31
      %p45 = scmp.eq.s32.totalorder %s23, 1
      %p46 = por %p44, %p45
      %p48 = scmp.ne.s32.totalorder %s31, %s47
      %p49 = scmp.eq.s32.totalorder %s23, 0
      %p50 = por %p48, %p49
      %s51 = ssub.s32 %s17, %s24
      %p52 = scmp.eq.s32.totalorder %s51, 0
      %s54 = sadd.s32 %s53, 1
      %s55 = scalar_select %p52, %s53, %s54
      %p58 = pneg %p52
      %p59 = scmp.eq.s32.totalorder %s17, 1
      %p60 = por %p58, %p59
      %p61 = scmp.ne.s32.totalorder %s53, %s56
      %p62 = scmp.eq.s32.totalorder %s17, 0
      %p63 = por %p61, %p62
      %p64 = scmp.ne.s32.totalorder %s53, %s56
      %p65 = scmp.eq.s32.totalorder %s22, 1
      %p66 = por %p64, %p65
      %p67 = scmp.ne.s32.totalorder %s56, %s57
      %p68 = scmp.eq.s32.totalorder %s22, 0
      %p69 = por %p67, %p68
      %p70 = scmp.ne.s32.totalorder %s56, %s57
      %p71 = scmp.eq.s32.totalorder %s23, 1
      %p72 = por %p70, %p71
      %p74 = scmp.ne.s32.totalorder %s57, %s73
      %p75 = scmp.eq.s32.totalorder %s23, 0
      %p76 = por %p74, %p75
      %s78 = sadd.s32 %s77, 1
      %p81 = scmp.eq.s32.totalorder %s17, 1
      %p82 = scmp.ne.s32.totalorder %s77, %s79
      %p83 = scmp.eq.s32.totalorder %s17, 0
      %p84 = por %p82, %p83
      %p85 = scmp.ne.s32.totalorder %s77, %s79
      %p86 = scmp.eq.s32.totalorder %s22, 1
      %p87 = por %p85, %p86
      %p88 = scmp.ne.s32.totalorder %s79, %s80
      %p89 = scmp.eq.s32.totalorder %s22, 0
      %p90 = por %p88, %p89
      %p91 = scmp.ne.s32.totalorder %s79, %s80
      %p92 = scmp.eq.s32.totalorder %s23, 1
      %p93 = por %p91, %p92
      %p95 = scmp.ne.s32.totalorder %s80, %s94
      %p96 = scmp.eq.s32.totalorder %s23, 0
      %p97 = por %p95, %p96
      %s99 = sadd.s32 %s98, 1
      %p102 = scmp.eq.s32.totalorder %s17, 1
      %p103 = scmp.ne.s32.totalorder %s98, %s100
      %p104 = scmp.eq.s32.totalorder %s17, 0
      %p105 = por %p103, %p104
      %p106 = scmp.ne.s32.totalorder %s98, %s100
      %p107 = scmp.eq.s32.totalorder %s22, 1
      %p108 = por %p106, %p107
      %p109 = scmp.ne.s32.totalorder %s100, %s101
      %p110 = scmp.eq.s32.totalorder %s22, 0
      %p111 = por %p109, %p110
      %p112 = scmp.ne.s32.totalorder %s100, %s101
      %p113 = scmp.eq.s32.totalorder %s23, 1
      %p114 = por %p112, %p113
      %p116 = scmp.ne.s32.totalorder %s101, %s115
      %p117 = scmp.eq.s32.totalorder %s23, 0
      %p118 = por %p116, %p117
      %s120 = sadd.s32 %s119, 1
      %p123 = scmp.eq.s32.totalorder %s17, 1
      %p124 = scmp.ne.s32.totalorder %s119, %s121
      %p125 = scmp.eq.s32.totalorder %s17, 0
      %p126 = por %p124, %p125
      %p127 = scmp.ne.s32.totalorder %s119, %s121
      %p128 = scmp.eq.s32.totalorder %s22, 1
      %p129 = por %p127, %p128
      %p130 = scmp.ne.s32.totalorder %s121, %s122
      %p131 = scmp.eq.s32.totalorder %s22, 0
      %p132 = por %p130, %p131
      %p133 = scmp.ne.s32.totalorder %s121, %s122
      %p134 = scmp.eq.s32.totalorder %s23, 1
      %p135 = por %p133, %p134
      %p137 = scmp.ne.s32.totalorder %s122, %s136
      %p138 = scmp.eq.s32.totalorder %s23, 0
      %p139 = por %p137, %p138
      %s141 = sadd.s32 %s140, 1
      %p144 = scmp.eq.s32.totalorder %s17, 1
      %p145 = scmp.ne.s32.totalorder %s140, %s142
      %p146 = scmp.eq.s32.totalorder %s17, 0
      %p147 = por %p145, %p146
      %p148 = scmp.ne.s32.totalorder %s140, %s142
      %p149 = scmp.eq.s32.totalorder %s22, 1
      %p150 = por %p148, %p149
      %p151 = scmp.ne.s32.totalorder %s142, %s143
      %p152 = scmp.eq.s32.totalorder %s22, 0
      %p153 = por %p151, %p152
      %p154 = scmp.ne.s32.totalorder %s142, %s143
      %p155 = scmp.eq.s32.totalorder %s23, 1
      %p156 = por %p154, %p155
      %p158 = scmp.ne.s32.totalorder %s143, %s157
      %p159 = scmp.eq.s32.totalorder %s23, 0
      %p160 = por %p158, %p159
      %s162 = sadd.s32 %s161, 1
      %p165 = scmp.eq.s32.totalorder %s17, 1
      %p166 = scmp.ne.s32.totalorder %s161, %s163
      %p167 = scmp.eq.s32.totalorder %s17, 0
      %p168 = por %p166, %p167
      %p169 = scmp.ne.s32.totalorder %s161, %s163
      %p170 = scmp.eq.s32.totalorder %s22, 1
      %p171 = por %p169, %p170
      %p172 = scmp.ne.s32.totalorder %s163, %s164
      %p173 = scmp.eq.s32.totalorder %s22, 0
      %p174 = por %p172, %p173
      %p175 = scmp.ne.s32.totalorder %s163, %s164
      %p176 = scmp.eq.s32.totalorder %s23, 1
      %p177 = por %p175, %p176
      %p179 = scmp.ne.s32.totalorder %s164, %s178
      %p180 = scmp.eq.s32.totalorder %s23, 0
      %p181 = por %p179, %p180
      %s183 = sadd.s32 %s182, 1
      %p186 = scmp.eq.s32.totalorder %s17, 1
      %p187 = scmp.ne.s32.totalorder %s182, %s184
      %p188 = scmp.eq.s32.totalorder %s17, 0
      %p189 = por %p187, %p188
      %p190 = scmp.ne.s32.totalorder %s182, %s184
      %p191 = scmp.eq.s32.totalorder %s22, 1
      %p192 = por %p190, %p191
      %p193 = scmp.ne.s32.totalorder %s184, %s185
      %p194 = scmp.eq.s32.totalorder %s22, 0
      %p195 = por %p193, %p194
      %p196 = scmp.ne.s32.totalorder %s184, %s185
      %p197 = scmp.eq.s32.totalorder %s23, 1
      %p198 = por %p196, %p197
      %p200 = scmp.ne.s32.totalorder %s185, %s199
      %p201 = scmp.eq.s32.totalorder %s23, 0
      %p202 = por %p200, %p201
      %s203 = ssub.s32 %s17, %s24
      %p204 = scmp.eq.s32.totalorder %s203, 0
      %s206 = sadd.s32 %s205, 1
      %s207 = scalar_select %p204, %s205, %s206
      %p210 = pneg %p204
      %p211 = scmp.eq.s32.totalorder %s17, 1
      %p212 = por %p210, %p211
      %p213 = scmp.ne.s32.totalorder %s205, %s208
      %p214 = scmp.eq.s32.totalorder %s17, 0
      %p215 = por %p213, %p214
      %p216 = scmp.ne.s32.totalorder %s205, %s208
      %p217 = scmp.eq.s32.totalorder %s22, 1
      %p218 = por %p216, %p217
      %p219 = scmp.ne.s32.totalorder %s208, %s209
      %p220 = scmp.eq.s32.totalorder %s22, 0
      %p221 = por %p219, %p220
      %p222 = scmp.ne.s32.totalorder %s208, %s209
      %p223 = scmp.eq.s32.totalorder %s23, 1
      %p224 = por %p222, %p223
      %p226 = scmp.ne.s32.totalorder %s209, %s225
      %p227 = scmp.eq.s32.totalorder %s23, 0
      %p228 = por %p226, %p227
      %p229 = scmp.le.s32.totalorder 1, %s17
      %p230 = scmp.lt.s32.totalorder %s17, 3
      %p231 = pnand %p229, %p230
      %p232 = pneg %p231
      // Predicated region
      $region9: #{tpu_custom_call.1} parent=5 // pred_check
        _
      $region10: #{tpu_custom_call.1} parent=5 // pred_check_branch
        %234 = sbr.rel (%p231) target = $region12
      $region11: #{tpu_custom_call.1} parent=5 // pred_region
        %s235 = ssub.s32 %s17, 1
        // Predicated region
        $region13: #{tpu_custom_call.1} parent=11 // pred_check
          %p236 = pneg %p90
        $region14: #{tpu_custom_call.1} parent=11 // pred_check_branch
          %238 = sbr.rel (%p236) target = $region16
        $region15: #{tpu_custom_call.1} parent=11 // pred_region
          _
        $region16: #{tpu_custom_call.1} parent=11 // pred_fallthru
          _
        // Predicated region
        $region17: #{tpu_custom_call.1} parent=11 // pred_check
          %p239 = pneg %p111
        $region18: #{tpu_custom_call.1} parent=11 // pred_check_branch
          %241 = sbr.rel (%p239) target = $region20
        $region19: #{tpu_custom_call.1} parent=11 // pred_region
          _
        $region20: #{tpu_custom_call.1} parent=11 // pred_fallthru
          _
        // Predicated region
        $region21: #{tpu_custom_call.1} parent=11 // pred_check
          %p242 = pneg %p132
        $region22: #{tpu_custom_call.1} parent=11 // pred_check_branch
          %244 = sbr.rel (%p242) target = $region24
        $region23: #{tpu_custom_call.1} parent=11 // pred_region
          _
        $region24: #{tpu_custom_call.1} parent=11 // pred_fallthru
          _
        // Predicated region
        $region25: #{tpu_custom_call.1} parent=11 // pred_check
          %p245 = pneg %p153
        $region26: #{tpu_custom_call.1} parent=11 // pred_check_branch
          %247 = sbr.rel (%p245) target = $region28
        $region27: #{tpu_custom_call.1} parent=11 // pred_region
          _
        $region28: #{tpu_custom_call.1} parent=11 // pred_fallthru
          _
        // Predicated region
        $region29: #{tpu_custom_call.1} parent=11 // pred_check
          %p248 = pneg %p174
        $region30: #{tpu_custom_call.1} parent=11 // pred_check_branch
          %250 = sbr.rel (%p248) target = $region32
        $region31: #{tpu_custom_call.1} parent=11 // pred_region
          _
        $region32: #{tpu_custom_call.1} parent=11 // pred_fallthru
          _
        // Predicated region
        $region33: #{tpu_custom_call.1} parent=11 // pred_check
          %p251 = pneg %p195
        $region34: #{tpu_custom_call.1} parent=11 // pred_check_branch
          %253 = sbr.rel (%p251) target = $region36
        $region35: #{tpu_custom_call.1} parent=11 // pred_region
          _
        $region36: #{tpu_custom_call.1} parent=11 // pred_fallthru
          _
      $region12: #{tpu_custom_call.1} parent=5 // pred_fallthru
        _
      %p254 = scmp.lt.s32.totalorder %s17, 2
      // Predicated region
      $region37: #{tpu_custom_call.1} parent=5 // pred_check
        %p255 = pneg %p254
      $region38: #{tpu_custom_call.1} parent=5 // pred_check_branch
        %257 = sbr.rel (%p255) target = $region40
      $region39: #{tpu_custom_call.1} parent=5 // pred_region
        // Predicated region
        $region41: #{tpu_custom_call.1} parent=39 // pred_check
          %p258 = pneg %p37
        $region42: #{tpu_custom_call.1} parent=39 // pred_check_branch
          %260 = sbr.rel (%p258) target = $region44
        $region43: #{tpu_custom_call.1} parent=39 // pred_region
          %s261 = sand.u32 %s27, 1
          %s262 = scalar_lea.sflag [#allocation3], %s261
          %s263 = sand.u32 %s27, 1
          %s264 = smul.addr %s263, 8
          %s265 = scalar_lea.vmem [#allocation2], %s264
          %s267 = ssub.s32 128, 128
          %268 = vsyncadd %s262, %s267
          %s269 = smul.addr %s17, 128
          %s270 = scalar_lea.hbm %s0, %s269
          %s272 = sshll.u32 %s265, 4
          %s273 = int_to_ptr.vmem [resolvable:$true] %s272
          %275 = dma.hbm_to_vmem [thread:$0]  %s270, 128, %s273, %s262
        $region44: #{tpu_custom_call.1} parent=39 // pred_fallthru
          _
        // Predicated region
        $region45: #{tpu_custom_call.1} parent=39 // pred_check
          %p276 = pneg %p63
        $region46: #{tpu_custom_call.1} parent=39 // pred_check_branch
          %278 = sbr.rel (%p276) target = $region48
        $region47: #{tpu_custom_call.1} parent=39 // pred_region
          %p279 = scmp.lt.s32.totalorder %s17, 1
          %s280 = scalar_select %p279, %s17, 1
          %s281 = smul.addr %s280, 8
          %s282 = scalar_lea.vmem %s1, %s281
        $region48: #{tpu_custom_call.1} parent=39 // pred_fallthru
          _
      $region40: #{tpu_custom_call.1} parent=5 // pred_fallthru
        _
      %p283 = scmp.le.s32.totalorder 1, %s17
      %p284 = scmp.lt.s32.totalorder %s17, 3
      %p285 = pnand %p283, %p284
      %p286 = pneg %p285
      // Predicated region
      $region49: #{tpu_custom_call.1} parent=5 // pred_check
        _
      $region50: #{tpu_custom_call.1} parent=5 // pred_check_branch
        %288 = sbr.rel (%p285) target = $region52
      $region51: #{tpu_custom_call.1} parent=5 // pred_region
        %s289 = ssub.s32 %s17, 1
        %s290 = sand.u32 %s30, 1
        %s291 = scalar_lea.sflag [#allocation3], %s290
        %s292 = sand.u32 %s30, 1
        %s293 = smul.addr %s292, 8
        %s294 = scalar_lea.vmem [#allocation2], %s293
        // Predicated region
        $region53: #{tpu_custom_call.1} parent=51 // pred_check
          %p295 = pneg %p43
        $region54: #{tpu_custom_call.1} parent=51 // pred_check_branch
          %297 = sbr.rel (%p295) target = $region56
        $region55: #{tpu_custom_call.1} parent=51 // pred_region
          %298 = dma.done %s291, 128
        $region56: #{tpu_custom_call.1} parent=51 // pred_fallthru
          _
        %s299 = sand.u32 %s30, 1
        %s300 = scalar_lea.sflag [#allocation3], %s299
        %s301 = sand.u32 %s30, 1
        %s302 = smul.addr %s301, 8
        %s303 = scalar_lea.vmem [#allocation2], %s302
        %p304 = pneg %p43
        %p305 = pneg %p40
        %p306 = scmp.lt.s32.totalorder %s22, 1
        %s307 = scalar_select %p306, %s22, 1
        %s308 = smul.addr %s307, 8
        %s309 = scalar_lea.vmem %s1, %s308
        %p310 = pneg %p69
        %p311 = pneg %p66
        %p312 = pneg %p90
        %p313 = pneg %p87
        %p314 = pneg %p111
        %p315 = pneg %p108
        %p316 = pneg %p132
        %p317 = pneg %p129
        %p318 = pneg %p153
        %p319 = pneg %p150
        %p320 = pneg %p174
        %p321 = pneg %p171
        %p322 = pneg %p195
        %p323 = pneg %p192
        %p324 = pneg %p221
        %p325 = pneg %p218
        %p326 = scmp.lt.s32.totalorder %s22, 1
        %s327 = scalar_select %p326, %s22, 1
        %s328 = smul.addr %s327, 8
        %s329 = scalar_lea.vmem %s8, %s328
        %p330 = scmp.lt.s32.totalorder %s22, 1
        %s331 = scalar_select %p330, %s22, 1
        %s332 = smul.addr %s331, 8
        %s333 = scalar_lea.vmem %s1, %s332
        %p334 = scmp.lt.s32.totalorder %s22, 1
        %s335 = scalar_select %p334, %s22, 1
        %s336 = smul.addr %s335, 8
        %s337 = scalar_lea.vmem %s8, %s336
        %v338 = vld [vmem:[%s294] sm:$0xff]
        %v339 = vld [vmem:[%s333] sm:$0xff]
        %v340 = vld [vmem:[%s2] sm:$0xff]
        %v341 = vld [vmem:[%s2 + $0x8] sm:$0xff]
        %v342 = vld [vmem:[%s2 + $0x10] sm:$0xff]
        %v343 = vld [vmem:[%s2 + $0x18] sm:$0xff]
        %v344 = vld [vmem:[%s3] sm:$0x1]
        %v346 = vlaneseq
        %v347 = vshrl.u32 %v346, 7
        %v348 = vsub.s32 0, %v347
        %v349 = vrot.slane %v344, %v348
        %vm351 = vcmask 261120
        %v353 = vsel %vm351, %v338, 0
        %355 = vmatprep.subr.mxu0 0.0
        %356 = vmatpush1.msra.mxu0 0.0
        %357 = vmatprep.subr.mxu0 0.0
        %358 = vmatpush1.msra.mxu0 0.0
        %359 = vmatprep.subr.mxu0 0.0
        %360 = vmatpush1.msra.mxu0 0.0
        %361 = vmatprep.subr.mxu0 0.0
        %362 = vmatpush1.msra.mxu0 0.0
        %363 = vmatprep.subr.mxu0 0.0
        %364 = vmatpush1.msra.mxu0 0.0
        %365 = vmatprep.subr.mxu0 0.0
        %366 = vmatpush1.msra.mxu0 0.0
        %367 = vmatprep.subr.mxu0 0.0
        %368 = vmatpush1.msra.mxu0 0.0
        %369 = vmatprep.subr.mxu0 0.0
        %370 = vmatpush1.msra.mxu0 0.0
        %371 = vmatprep.subr.mxu0 0.0
        %372 = vmatpush1.msra.mxu0 0.0
        %373 = vmatprep.subr.mxu0 0.0
        %374 = vmatpush1.msra.mxu0 0.0
        %375 = vmatprep.subr.mxu0 0.0
        %376 = vmatpush1.msra.mxu0 0.0
        %377 = vmatprep.subr.mxu0 0.0
        %378 = vmatpush1.msra.mxu0 0.0
        %379 = vmatprep.subr.mxu0 0.0
        %380 = vmatpush1.msra.mxu0 %v343
        %381 = vmatprep.subr.mxu0 0.0
        %382 = vmatpush1.msra.mxu0 %v342
        %383 = vmatprep.subr.mxu0 0.0
        %384 = vmatpush1.msra.mxu0 %v341
        %385 = vmatprep.subr.mxu0 0.0
        %386 = vmatpush1.msra.mxu0 %v340
        %387 = vmatprep.subr.mxu0 0.0
        %388 = vmatpush2.msra.mxu0 0.0
        %389 = vmatprep.subr.mxu0 0.0
        %390 = vmatpush2.msra.mxu0 0.0
        %391 = vmatprep.subr.mxu0 0.0
        %392 = vmatpush2.msra.mxu0 0.0
        %393 = vmatprep.subr.mxu0 0.0
        %394 = vmatpush2.msra.mxu0 0.0
        %395 = vmatprep.subr.mxu0 0.0
        %396 = vmatpush2.msra.mxu0 0.0
        %397 = vmatprep.subr.mxu0 0.0
        %398 = vmatpush2.msra.mxu0 0.0
        %399 = vmatprep.subr.mxu0 0.0
        %400 = vmatpush2.msra.mxu0 0.0
        %401 = vmatprep.subr.mxu0 0.0
        %402 = vmatpush2.msra.mxu0 0.0
        %403 = vmatprep.subr.mxu0 0.0
        %404 = vmatpush2.msra.mxu0 0.0
        %405 = vmatprep.subr.mxu0 0.0
        %406 = vmatpush2.msra.mxu0 0.0
        %407 = vmatprep.subr.mxu0 0.0
        %408 = vmatpush2.msra.mxu0 0.0
        %409 = vmatprep.subr.mxu0 0.0
        %410 = vmatpush2.msra.mxu0 0.0
        %411 = vmatprep.subr.mxu0 0.0
        %412 = vmatpush2.msra.mxu0 0.0
        %413 = vmatprep.subr.mxu0 0.0
        %414 = vmatpush2.msra.mxu0 0.0
        %415 = vmatprep.subr.mxu0 0.0
        %416 = vmatpush2.msra.mxu0 0.0
        %417 = vmatprep.subr.mxu0 0.0
        %418 = vmatpush2.msra.mxu0 0.0
        %419 = vmatprep.mubr.f32.mxu0 0.0
        %420 = vmatmul.mubr.f32.gmra.mxu0 %v353
        %v421 = vpop.f32.mrf.mxu0
        %v422 = vadd.f32 %v349, %v421
        %v423 = vpop.f32.mrf.mxu0
        %424 = vdwg.mxu0
        %v425 = vmax.f32 %v422, 0.0
        %v426 = vmin.f32 %v425, 6.0
        %v427 = vld [vmem:[%s4] sm:$0xff]
        %v428 = vld [vmem:[%s4 + $0x8] sm:$0xff]
        %v429 = vld [vmem:[%s4 + $0x10] sm:$0xff]
        %v430 = vld [vmem:[%s4 + $0x18] sm:$0xff]
        %v431 = vld [vmem:[%s4 + $0x20] sm:$0xff]
        %v432 = vld [vmem:[%s4 + $0x28] sm:$0xff]
        %v433 = vld [vmem:[%s4 + $0x30] sm:$0xff]
        %v434 = vld [vmem:[%s4 + $0x38] sm:$0xff]
        %v435 = vld [vmem:[%s4 + $0x40] sm:$0xff]
        %v436 = vld [vmem:[%s4 + $0x48] sm:$0xff]
        %v437 = vld [vmem:[%s4 + $0x50] sm:$0xff]
        %v438 = vld [vmem:[%s4 + $0x58] sm:$0xff]
        %v439 = vld [vmem:[%s4 + $0x60] sm:$0xff]
        %v440 = vld [vmem:[%s4 + $0x68] sm:$0xff]
        %v441 = vld [vmem:[%s4 + $0x70] sm:$0xff]
        %v442 = vld [vmem:[%s4 + $0x78] sm:$0xff]
        %v443 = vld [vmem:[%s5] sm:$0x1]
        %v445 = vlaneseq
        %v446 = vshrl.u32 %v445, 7
        %v447 = vsub.s32 0, %v446
        %v448 = vrot.slane %v443, %v447
        %450 = vmatprep.subr.mxu0 0.0
        %451 = vmatpush1.msra.mxu0 %v442
        %452 = vmatprep.subr.mxu0 0.0
        %453 = vmatpush1.msra.mxu0 %v441
        %454 = vmatprep.subr.mxu0 0.0
        %455 = vmatpush1.msra.mxu0 %v440
        %456 = vmatprep.subr.mxu0 0.0
        %457 = vmatpush1.msra.mxu0 %v439
        %458 = vmatprep.subr.mxu0 0.0
        %459 = vmatpush1.msra.mxu0 %v438
        %460 = vmatprep.subr.mxu0 0.0
        %461 = vmatpush1.msra.mxu0 %v437
        %462 = vmatprep.subr.mxu0 0.0
        %463 = vmatpush1.msra.mxu0 %v436
        %464 = vmatprep.subr.mxu0 0.0
        %465 = vmatpush1.msra.mxu0 %v435
        %466 = vmatprep.subr.mxu0 0.0
        %467 = vmatpush1.msra.mxu0 %v434
        %468 = vmatprep.subr.mxu0 0.0
        %469 = vmatpush1.msra.mxu0 %v433
        %470 = vmatprep.subr.mxu0 0.0
        %471 = vmatpush1.msra.mxu0 %v432
        %472 = vmatprep.subr.mxu0 0.0
        %473 = vmatpush1.msra.mxu0 %v431
        %474 = vmatprep.subr.mxu0 0.0
        %475 = vmatpush1.msra.mxu0 %v430
        %476 = vmatprep.subr.mxu0 0.0
        %477 = vmatpush1.msra.mxu0 %v429
        %478 = vmatprep.subr.mxu0 0.0
        %479 = vmatpush1.msra.mxu0 %v428
        %480 = vmatprep.subr.mxu0 0.0
        %481 = vmatpush1.msra.mxu0 %v427
        %482 = vmatprep.subr.mxu0 0.0
        %483 = vmatpush2.msra.mxu0 0.0
        %484 = vmatprep.subr.mxu0 0.0
        %485 = vmatpush2.msra.mxu0 0.0
        %486 = vmatprep.subr.mxu0 0.0
        %487 = vmatpush2.msra.mxu0 0.0
        %488 = vmatprep.subr.mxu0 0.0
        %489 = vmatpush2.msra.mxu0 0.0
        %490 = vmatprep.subr.mxu0 0.0
        %491 = vmatpush2.msra.mxu0 0.0
        %492 = vmatprep.subr.mxu0 0.0
        %493 = vmatpush2.msra.mxu0 0.0
        %494 = vmatprep.subr.mxu0 0.0
        %495 = vmatpush2.msra.mxu0 0.0
        %496 = vmatprep.subr.mxu0 0.0
        %497 = vmatpush2.msra.mxu0 0.0
        %498 = vmatprep.subr.mxu0 0.0
        %499 = vmatpush2.msra.mxu0 0.0
        %500 = vmatprep.subr.mxu0 0.0
        %501 = vmatpush2.msra.mxu0 0.0
        %502 = vmatprep.subr.mxu0 0.0
        %503 = vmatpush2.msra.mxu0 0.0
        %504 = vmatprep.subr.mxu0 0.0
        %505 = vmatpush2.msra.mxu0 0.0
        %506 = vmatprep.subr.mxu0 0.0
        %507 = vmatpush2.msra.mxu0 0.0
        %508 = vmatprep.subr.mxu0 0.0
        %509 = vmatpush2.msra.mxu0 0.0
        %510 = vmatprep.subr.mxu0 0.0
        %511 = vmatpush2.msra.mxu0 0.0
        %512 = vmatprep.subr.mxu0 0.0
        %513 = vmatpush2.msra.mxu0 0.0
        %514 = vmatprep.mubr.f32.mxu0 0.0
        %515 = vmatmul.mubr.f32.gmra.mxu0 %v426
        %v516 = vpop.f32.mrf.mxu0
        %v517 = vadd.f32 %v448, %v516
        %v518 = vpop.f32.mrf.mxu0
        %519 = vdwg.mxu0
        %v520 = vmax.f32 %v517, 0.0
        %v521 = vmin.f32 %v520, 6.0
        %v522 = vld [vmem:[%s6] sm:$0xff]
        %v523 = vld [vmem:[%s6 + $0x8] sm:$0xff]
        %v524 = vld [vmem:[%s6 + $0x10] sm:$0xff]
        %v525 = vld [vmem:[%s6 + $0x18] sm:$0xff]
        %v526 = vld [vmem:[%s6 + $0x20] sm:$0xff]
        %v527 = vld [vmem:[%s6 + $0x28] sm:$0xff]
        %v528 = vld [vmem:[%s6 + $0x30] sm:$0xff]
        %v529 = vld [vmem:[%s6 + $0x38] sm:$0xff]
        %v530 = vld [vmem:[%s6 + $0x40] sm:$0xff]
        %v531 = vld [vmem:[%s6 + $0x48] sm:$0xff]
        %v532 = vld [vmem:[%s6 + $0x50] sm:$0xff]
        %v533 = vld [vmem:[%s6 + $0x58] sm:$0xff]
        %v534 = vld [vmem:[%s6 + $0x60] sm:$0xff]
        %v535 = vld [vmem:[%s6 + $0x68] sm:$0xff]
        %v536 = vld [vmem:[%s6 + $0x70] sm:$0xff]
        %v537 = vld [vmem:[%s6 + $0x78] sm:$0xff]
        %v538 = vld [vmem:[%s7] sm:$0x1]
        %v540 = vlaneseq
        %v541 = vshrl.u32 %v540, 7
        %v542 = vsub.s32 0, %v541
        %v543 = vrot.slane %v538, %v542
        %545 = vmatprep.subr.mxu0 0.0
        %546 = vmatpush1.msra.mxu0 %v537
        %547 = vmatprep.subr.mxu0 0.0
        %548 = vmatpush1.msra.mxu0 %v536
        %549 = vmatprep.subr.mxu0 0.0
        %550 = vmatpush1.msra.mxu0 %v535
        %551 = vmatprep.subr.mxu0 0.0
        %552 = vmatpush1.msra.mxu0 %v534
        %553 = vmatprep.subr.mxu0 0.0
        %554 = vmatpush1.msra.mxu0 %v533
        %555 = vmatprep.subr.mxu0 0.0
        %556 = vmatpush1.msra.mxu0 %v532
        %557 = vmatprep.subr.mxu0 0.0
        %558 = vmatpush1.msra.mxu0 %v531
        %559 = vmatprep.subr.mxu0 0.0
        %560 = vmatpush1.msra.mxu0 %v530
        %561 = vmatprep.subr.mxu0 0.0
        %562 = vmatpush1.msra.mxu0 %v529
        %563 = vmatprep.subr.mxu0 0.0
        %564 = vmatpush1.msra.mxu0 %v528
        %565 = vmatprep.subr.mxu0 0.0
        %566 = vmatpush1.msra.mxu0 %v527
        %567 = vmatprep.subr.mxu0 0.0
        %568 = vmatpush1.msra.mxu0 %v526
        %569 = vmatprep.subr.mxu0 0.0
        %570 = vmatpush1.msra.mxu0 %v525
        %571 = vmatprep.subr.mxu0 0.0
        %572 = vmatpush1.msra.mxu0 %v524
        %573 = vmatprep.subr.mxu0 0.0
        %574 = vmatpush1.msra.mxu0 %v523
        %575 = vmatprep.subr.mxu0 0.0
        %576 = vmatpush1.msra.mxu0 %v522
        %577 = vmatprep.subr.mxu0 0.0
        %578 = vmatpush2.msra.mxu0 0.0
        %579 = vmatprep.subr.mxu0 0.0
        %580 = vmatpush2.msra.mxu0 0.0
        %581 = vmatprep.subr.mxu0 0.0
        %582 = vmatpush2.msra.mxu0 0.0
        %583 = vmatprep.subr.mxu0 0.0
        %584 = vmatpush2.msra.mxu0 0.0
        %585 = vmatprep.subr.mxu0 0.0
        %586 = vmatpush2.msra.mxu0 0.0
        %587 = vmatprep.subr.mxu0 0.0
        %588 = vmatpush2.msra.mxu0 0.0
        %589 = vmatprep.subr.mxu0 0.0
        %590 = vmatpush2.msra.mxu0 0.0
        %591 = vmatprep.subr.mxu0 0.0
        %592 = vmatpush2.msra.mxu0 0.0
        %593 = vmatprep.subr.mxu0 0.0
        %594 = vmatpush2.msra.mxu0 0.0
        %595 = vmatprep.subr.mxu0 0.0
        %596 = vmatpush2.msra.mxu0 0.0
        %597 = vmatprep.subr.mxu0 0.0
        %598 = vmatpush2.msra.mxu0 0.0
        %599 = vmatprep.subr.mxu0 0.0
        %600 = vmatpush2.msra.mxu0 0.0
        %601 = vmatprep.subr.mxu0 0.0
        %602 = vmatpush2.msra.mxu0 0.0
        %603 = vmatprep.subr.mxu0 0.0
        %604 = vmatpush2.msra.mxu0 0.0
        %605 = vmatprep.subr.mxu0 0.0
        %606 = vmatpush2.msra.mxu0 0.0
        %607 = vmatprep.subr.mxu0 0.0
        %608 = vmatpush2.msra.mxu0 0.0
        %609 = vmatprep.mubr.f32.mxu0 0.0
        %610 = vmatmul.mubr.f32.gmra.mxu0 %v521
        %v611 = vpop.f32.mrf.mxu0
        %v612 = vadd.f32 %v543, %v611
        %v613 = vpop.f32.mrf.mxu0
        %614 = vdwg.mxu0
        %v615 = vtanh.pop %v612
        %v616 = vmul.f32 %v615, 2.0
        %v617 = vmax.f32 %v612, -0.6931472
        %v618 = vmin.f32 %v617, 0.6931472
        %v619 = vmax.f32 %v618, 0.0
        %v620 = vand.u32 2147483647, %v618
        %v621 = vsub.f32 0.0, %v620
        %v622 = vmul.f32 %v621, 1.442695
        %v623 = vpow.pop %v622
        %v624 = vadd.f32 %v623, 1.0
        %v625 = vlog2.pop %v624
        %v626 = vmul.f32 %v625, 0.6931472
        %v627 = vmul.f32 -0.5, %v623
        %v628 = vadd.f32 %v627, 1.0
        %v629 = vmul.f32 %v628, %v623
        %v630 = vand.u32 2147483647, %v623
        %vm631 = vcmp.lt.f32.partialorder %v630, 0.0004427343
        %v632 = vsel %vm631, %v629, %v626
        %v633 = vadd.f32 %v619, %v632
        %v634 = vlog2.pop %v633
        %v635 = vmul.f32 %v634, 0.6931472
        %v636 = vmul.f32 %v633, %v633
        %v637 = vrcp.pop %v636
        %v638 = vsub.f32 %v339, %v616
        %v639 = vmul.f32 %v638, %v638
        %v640 = vmul.f32 %v639, -0.5
        %642 = vrot.lane.b32.xlu0 %v637, 124
        %v643 = vpop.permute.xlu0 %642
        %v645 = vmul.f32 %v640, %v643
        %647 = vrot.lane.b32.xlu0 %v635, 124
        %v648 = vpop.permute.xlu0 %647
        %v650 = vsub.f32 %v645, %v648
        %v651 = vsub.f32 %v650, 0.9189385
        %vm652 = vcmask 31744
        %v653 = vsel %vm652, %v651, 0.0
        %654 = vadd.xlane.f32.xlu0 %v653
        %v655 = vpop.xlane.xlu0 %654
        %v656 = vsel %vm652, %v648, 0.0
        %657 = vadd.xlane.f32.xlu0 %v656
        %v658 = vpop.xlane.xlu0 %657
        %v659 = vadd.f32 %v658, 5.675754
        %v660 = vlaneseq
        %v661 = vand.u32 %v660, 127
        %vm662 = vcmp.eq.s32.totalorder %v661, 0
        %vm663 = vcmp.eq.s32.totalorder %v661, 1
        %vm664 = vcmp.eq.s32.totalorder %v661, 2
        %v665 = vsel %vm664, %v659, 0.0
        %667 = vset.pattern.permute.xlu0 8
        %668 = vperm.xlu0 %667, %v612
        %v669 = vpop.permute.xlu0 %668
        %v671 = vsel %vm663, %v669, %v665
        %v672 = vsel %vm662, %v655, %v671
        %vm673 = vcmask 64512
        %674 = vst.msk [vmem:[%s337] sm:$0xff] %vm673, %v672
        %p675 = scmp.lt.s32.totalorder %s22, 1
        %s676 = scalar_select %p675, %s22, 1
        %s677 = smul.addr %s676, 8
        %s678 = scalar_lea.vmem %s8, %s677
        // Predicated region
        $region57: #{tpu_custom_call.1} parent=51 // pred_check
          %p679 = pneg %p218
        $region58: #{tpu_custom_call.1} parent=51 // pred_check_branch
          %681 = sbr.rel (%p679) target = $region60
        $region59: #{tpu_custom_call.1} parent=51 // pred_region
          _
        $region60: #{tpu_custom_call.1} parent=51 // pred_fallthru
          _
      $region52: #{tpu_custom_call.1} parent=5 // pred_fallthru
        _
      %p682 = scmp.le.s32.totalorder 2, %s17
      // Predicated region
      $region61: #{tpu_custom_call.1} parent=5 // pred_check
        %p683 = pneg %p682
      $region62: #{tpu_custom_call.1} parent=5 // pred_check_branch
        %685 = sbr.rel (%p683) target = $region64
      $region63: #{tpu_custom_call.1} parent=5 // pred_region
        %s686 = ssub.s32 %s17, 2
        // Predicated region
        $region65: #{tpu_custom_call.1} parent=63 // pred_check
          %p687 = pneg %p224
        $region66: #{tpu_custom_call.1} parent=63 // pred_check_branch
          %689 = sbr.rel (%p687) target = $region68
        $region67: #{tpu_custom_call.1} parent=63 // pred_region
          %p690 = scmp.lt.s32.totalorder %s23, 1
          %s691 = scalar_select %p690, %s23, 1
          %s692 = smul.addr %s691, 8
          %s693 = scalar_lea.vmem %s8, %s692
        $region68: #{tpu_custom_call.1} parent=63 // pred_fallthru
          _
      $region64: #{tpu_custom_call.1} parent=5 // pred_fallthru
        _
    $region6: #{tpu_custom_call.1} parent=1 // loop_footer
      %s21 = sadd.s32 1, %s17
    $region7: #{tpu_custom_call.1} parent=1 // loop_footer_branch
      %16 = sbr.rel target = $region3
    $region8: #{tpu_custom_call.1} parent=1 // loop_exit
      _
    %694 = vsyncpa [#allocation3], 1
    %s695 = scalar_lea.sflag [#allocation3], 1
    %696 = vsyncpa %s695, 1

</llo_original>
